<compile_context>
chip_gen: v6e
topology: v6e:2x2x1
jax: 0.10.0
libtpu: 0.0.40
codegen_flags: <defaults>
</compile_context>

<pallas_src>
import jax
import jax.numpy as jnp
from jax.experimental import pallas as pl
from jax.experimental.pallas import tpu as pltpu

_EPS = 1e-5
_MAX_ROW_TILE = 1024
_F32_BYTES = 4


# ----------------------------- tiling helpers -----------------------------
def _vmem_capacity_bytes():
    try:
        cap = int(getattr(pltpu.get_tpu_info(), "vmem_capacity_bytes"))
        if cap > 0:
            return cap
    except Exception:
        pass
    # Conservative fallback: v7x has 64 MiB of VMEM per TensorCore.
    return 64 * 1024 * 1024


def _round_up(x, m):
    return ((x + m - 1) // m) * m


def _choose_row_tile(R, L):
    """Largest row tile (multiple of 8, <= _MAX_ROW_TILE) such that the
    double-buffered input+output blocks fit in ~half of VMEM."""
    cap = _vmem_capacity_bytes()
    budget = cap // 2
    # 2 streamed arrays (x in, y out) x 2 buffers each.
    bytes_per_row = 4 * L * _F32_BYTES
    tr = budget // max(bytes_per_row, 1)
    tr = max(8, min(_MAX_ROW_TILE, (tr // 8) * 8))
    tr = min(tr, _round_up(R, 8))
    vmem_limit = (cap * 3) // 4
    return tr, vmem_limit


def _pad_rows(a, R_pad):
    R = a.shape[0]
    if R_pad == R:
        return a
    return jnp.pad(a, ((0, R_pad - R), (0, 0)))


def _compiler_params(vmem_limit):
    return pltpu.CompilerParams(
        dimension_semantics=("parallel",),
        vmem_limit_bytes=int(vmem_limit),
    )


# ------------------------------- kernels ----------------------------------
def _fused_row_norm_kernel(x_ref, o_ref):
    """Per-row normalization in one pass: sum & sumsq -> mean/var -> apply."""
    x = x_ref[...].astype(jnp.float32)
    inv_n = 1.0 / x.shape[-1]
    s = jnp.sum(x, axis=-1, keepdims=True)
    ss = jnp.sum(x * x, axis=-1, keepdims=True)
    mean = s * inv_n
    var = ss * inv_n - mean * mean
    inv = jax.lax.rsqrt(var + _EPS)
    o_ref[...] = ((x - mean) * inv).astype(o_ref.dtype)


def _row_stats_kernel(x_ref, o_ref):
    """Per-row (sum, sumsq) over the lane dimension."""
    x = x_ref[...].astype(jnp.float32)
    o_ref[:, 0:1] = jnp.sum(x, axis=-1, keepdims=True)
    o_ref[:, 1:2] = jnp.sum(x * x, axis=-1, keepdims=True)


def _row_apply_kernel(x_ref, st_ref, o_ref):
    """Apply precomputed per-row (mean, inv_std)."""
    x = x_ref[...].astype(jnp.float32)
    mean = st_ref[:, 0:1]
    inv = st_ref[:, 1:2]
    o_ref[...] = ((x - mean) * inv).astype(o_ref.dtype)


# ------------------------------- wrappers ----------------------------------
def _row_normalize(x2d):
    """Fused per-row normalization (instance-norm rows). x2d: (R, L)."""
    R, L = x2d.shape
    tr, vmem_limit = _choose_row_tile(R, L)
    R_pad = _round_up(R, tr)
    xp = _pad_rows(x2d, R_pad)
    y = pl.pallas_call(
        _fused_row_norm_kernel,
        out_shape=jax.ShapeDtypeStruct((R_pad, L), x2d.dtype),
        grid_spec=pl.GridSpec(
            grid=(R_pad // tr,),
            in_specs=[pl.BlockSpec((tr, L), lambda i: (i, 0))],
            out_specs=pl.BlockSpec((tr, L), lambda i: (i, 0)),
        ),
        compiler_params=_compiler_params(vmem_limit),
    )(xp)
    return y[:R] if R_pad != R else y


def _row_stats(x2d):
    """Per-row (sum, sumsq) over lanes. Returns (R, 2) float32."""
    R, L = x2d.shape
    tr, vmem_limit = _choose_row_tile(R, L)
    R_pad = _round_up(R, tr)
    xp = _pad_rows(x2d, R_pad)
    st = pl.pallas_call(
        _row_stats_kernel,
        out_shape=jax.ShapeDtypeStruct((R_pad, 2), jnp.float32),
        grid_spec=pl.GridSpec(
            grid=(R_pad // tr,),
            in_specs=[pl.BlockSpec((tr, L), lambda i: (i, 0))],
            out_specs=pl.BlockSpec((tr, 2), lambda i: (i, 0)),
        ),
        compiler_params=_compiler_params(vmem_limit),
    )(xp)
    return st[:R] if R_pad != R else st


def _row_apply(x2d, row_stats):
    """y[r, :] = (x[r, :] - mean[r]) * inv[r]; row_stats: (R, 2)."""
    R, L = x2d.shape
    tr, vmem_limit = _choose_row_tile(R, L)
    R_pad = _round_up(R, tr)
    xp = _pad_rows(x2d, R_pad)
    stp = _pad_rows(row_stats.astype(jnp.float32), R_pad)
    y = pl.pallas_call(
        _row_apply_kernel,
        out_shape=jax.ShapeDtypeStruct((R_pad, L), x2d.dtype),
        grid_spec=pl.GridSpec(
            grid=(R_pad // tr,),
            in_specs=[pl.BlockSpec((tr, L), lambda i: (i, 0)),
                      pl.BlockSpec((tr, 2), lambda i: (i, 0))],
            out_specs=pl.BlockSpec((tr, L), lambda i: (i, 0)),
        ),
        compiler_params=_compiler_params(vmem_limit),
    )(xp, stp)
    return y[:R] if R_pad != R else y


def _batch_rowwise_stats(row_stats, parts, N, C, H, W):
    """Reduce per-row (sum, sumsq) to per-channel (mean, inv_std), broadcast
    back to per-row stats. Tiny (parts*N*C values) -> plain JAX."""
    count = float(N * H * W)
    st = row_stats.reshape(parts, N, C, 2)
    tot = jnp.sum(st, axis=1)                     # (parts, C, 2)
    mean = tot[..., 0] / count
    ex2 = tot[..., 1] / count
    var = ex2 - mean * mean
    inv = jax.lax.rsqrt(var + _EPS)
    per_c = jnp.stack([mean, inv], axis=-1)       # (parts, C, 2)
    per_row = jnp.broadcast_to(per_c[:, None, :, :], (parts, N, C, 2))
    return per_row.reshape(parts * N * C, 2)


def normalization_forward(x, norm_type):
    """Forward pass of Normalization(in_chans, type=norm_type)."""
    if norm_type == 'none':
        return x
    if norm_type not in ('instance', 'batch'):
        raise ValueError('Invalid normalization type: %s' % norm_type)

    is_complex = jnp.iscomplexobj(x)
    if is_complex:
        # Fuse real/imag into a single pallas_call by stacking along rows.
        parts = 2
        xr = jnp.stack([jnp.real(x), jnp.imag(x)], axis=0)   # (2, N, C, H, W)
    else:
        parts = 1
        xr = x[None]                                          # (1, N, C, H, W)

    _, N, C, H, W = xr.shape
    x2d = xr.reshape(parts * N * C, H * W)   # contiguous reshape: free in HBM

    if norm_type == 'instance':
        y2d = _row_normalize(x2d)
    else:  # 'batch' -- training-mode batch statistics, no transposes
        row_st = _row_stats(x2d)                              # (parts*N*C, 2)
        row_mi = _batch_rowwise_stats(row_st, parts, N, C, H, W)
        y2d = _row_apply(x2d, row_mi)

    y = y2d.reshape(parts, N, C, H, W)
    if is_complex:
        return jax.lax.complex(y[0], y[1])
    return y[0]


# ---------------- pure-JAX references for verification ----------------
def _ref_instance(x):
    m = jnp.mean(x, axis=(2, 3), keepdims=True)
    v = jnp.mean((x - m) ** 2, axis=(2, 3), keepdims=True)
    return (x - m) / jnp.sqrt(v + _EPS)


def _ref_batch(x):
    m = jnp.mean(x, axis=(0, 2, 3), keepdims=True)
    v = jnp.mean((x - m) ** 2, axis=(0, 2, 3), keepdims=True)
    return (x - m) / jnp.sqrt(v + _EPS)


if __name__ == "__main__":
    key = jax.random.PRNGKey(0)
    k1, k2, k3 = jax.random.split(key, 3)

    N, C, H, W = 2, 4, 16, 16
    x = jax.random.normal(k1, (N, C, H, W), dtype=jnp.float32)
    x_c = jax.lax.complex(
        jax.random.normal(k2, (N, C, H, W), dtype=jnp.float32),
        jax.random.normal(k3, (N, C, H, W), dtype=jnp.float32),
    )

    # 'none'
    y_none = jax.block_until_ready(normalization_forward(x, 'none'))
    assert jnp.allclose(y_none, x)

    # 'instance' (real)
    y_inst = jax.block_until_ready(normalization_forward(x, 'instance'))
    assert jnp.allclose(y_inst, _ref_instance(x), atol=1e-4, rtol=1e-5)

    # 'batch' (real, training-mode batch statistics)
    y_bn = jax.block_until_ready(normalization_forward(x, 'batch'))
    assert jnp.allclose(y_bn, _ref_batch(x), atol=1e-4, rtol=1e-5)

    # 'instance' (complex) — norm applied to real and imag parts separately
    y_ci = jax.block_until_ready(normalization_forward(x_c, 'instance'))
    assert jnp.allclose(jnp.real(y_ci), _ref_instance(jnp.real(x_c)),
                        atol=1e-4, rtol=1e-5)
    assert jnp.allclose(jnp.imag(y_ci), _ref_instance(jnp.imag(x_c)),
                        atol=1e-4, rtol=1e-5)

    # 'batch' (complex)
    y_cb = jax.block_until_ready(normalization_forward(x_c, 'batch'))
    assert jnp.allclose(jnp.real(y_cb), _ref_batch(jnp.real(x_c)),
                        atol=1e-4, rtol=1e-5)
    assert jnp.allclose(jnp.imag(y_cb), _ref_batch(jnp.imag(x_c)),
                        atol=1e-4, rtol=1e-5)

    print("KERNEL_OK")
</pallas_src>

<mosaic_0001>
module attributes {stable_mosaic.version = 11 : i64} {
  func.func @_fused_row_norm_kernel(%arg0: i32, %arg1: memref<8x256xf32, #tpu.memory_space<vmem>>, %arg2: memref<8x256xf32, #tpu.memory_space<vmem>>) attributes {dimension_semantics = [#tpu.dimension_semantics<parallel>], iteration_bounds = array<i64: 1>, scalar_prefetch = 0 : i64, scratch_operands = 0 : i64, tpu.core_type = #tpu.core_type<tc>, window_params = [{transform_indices = @transform_0, window_bounds = array<i64: 8, 256>}, {transform_indices = @transform_1, window_bounds = array<i64: 8, 256>}]} {
    %c0 = arith.constant 0 : index
    %c0_0 = arith.constant 0 : index
    %0 = vector.load %arg1[%c0, %c0_0] : memref<8x256xf32, #tpu.memory_space<vmem>>, vector<8x256xf32>
    %cst = arith.constant dense<0.000000e+00> : vector<8xf32>
    %1 = vector.multi_reduction <add>, %0, %cst [1] : vector<8x256xf32> to vector<8xf32>
    %2 = vector.shape_cast %1 : vector<8xf32> to vector<8x1xf32>
    %3 = arith.mulf %0, %0 : vector<8x256xf32>
    %cst_1 = arith.constant dense<0.000000e+00> : vector<8xf32>
    %4 = vector.multi_reduction <add>, %3, %cst_1 [1] : vector<8x256xf32> to vector<8xf32>
    %5 = vector.shape_cast %4 : vector<8xf32> to vector<8x1xf32>
    %cst_2 = arith.constant 3.906250e-03 : f32
    %6 = vector.broadcast %cst_2 : f32 to vector<8x1xf32>
    %7 = arith.mulf %2, %6 : vector<8x1xf32>
    %cst_3 = arith.constant 3.906250e-03 : f32
    %8 = vector.broadcast %cst_3 : f32 to vector<8x1xf32>
    %9 = arith.mulf %5, %8 : vector<8x1xf32>
    %10 = arith.mulf %7, %7 : vector<8x1xf32>
    %11 = arith.subf %9, %10 : vector<8x1xf32>
    %cst_4 = arith.constant 9.99999974E-6 : f32
    %12 = vector.broadcast %cst_4 : f32 to vector<8x1xf32>
    %13 = arith.addf %11, %12 : vector<8x1xf32>
    %14 = math.rsqrt %13 : vector<8x1xf32>
    %15 = vector.broadcast %7 : vector<8x1xf32> to vector<8x256xf32>
    %16 = arith.subf %0, %15 : vector<8x256xf32>
    %17 = vector.broadcast %14 : vector<8x1xf32> to vector<8x256xf32>
    %18 = arith.mulf %16, %17 : vector<8x256xf32>
    %c0_5 = arith.constant 0 : index
    %c0_6 = arith.constant 0 : index
    %19 = vector.load %arg2[%c0_5, %c0_6] : memref<8x256xf32, #tpu.memory_space<vmem>>, vector<8x256xf32>
    tpu.vector_store %arg2[%c0_5, %c0_6], %18 {strides = array<i32>} : memref<8x256xf32, #tpu.memory_space<vmem>>, vector<8x256xf32>,
    return
  }
  func.func @transform_0(%arg0: i32) -> (i32, i32) {
    %c0_i32 = arith.constant 0 : i32
    %c0_i32_0 = arith.constant 0 : i32
    return %arg0, %c0_i32 : i32, i32
  }
  func.func @transform_1(%arg0: i32) -> (i32, i32) {
    %c0_i32 = arith.constant 0 : i32
    %c0_i32_0 = arith.constant 0 : i32
    return %arg0, %c0_i32 : i32, i32
  }
}

</mosaic_0001>

<llo_original>
// kernel: tpu_custom_call.1
$region0: #{tpu_custom_call.1}
  #allocation0 [shape = 'u32[]', space=smem, size = 0x4, offset = 0x4, fixed_abs, tag = 'smem constant byte address 0x4 - core index']
  #allocation1 [shape = 'u32[144,128]{1,0:T(1,128)}', space=vmem, size = 0x12000, scoped, tag = 'internal scratch']
  %s0 = inlined_call_operand.hbm [shape: f32[8,256], index: 0, kind: input, shape index: {}]
  %s1 = inlined_call_operand.hbm [shape: f32[8,256], index: 1, kind: output, shape index: {}]
  %s2 = sld [smem:[#allocation0]]
  $region18: #{tpu_custom_call.1} parent=0
    _
  %s4 = ssub.s32 1, %s2
  %s5 = scalar_select 0, %s4, %s2
  $region1: #{tpu_custom_call.1} parent=0
    #allocation2 [shape = 'u8[8192]{0}', space=vmem, size = 0x2000, scoped, tag = 'input window, operand 0, single buffered']
    #allocation3 [shape = 's32[1]{0}', space=sflag, size = 0x4, scoped, tag = 'scoped memory for tpu_custom_call.1']
    #allocation4 [shape = 's32[1]{0}', space=sflag, size = 0x4, scoped, tag = 'scoped memory for tpu_custom_call.1']
    #allocation5 [shape = 'u8[8192]{0}', space=vmem, size = 0x2000, scoped, tag = 'output window, operand 0, single buffered']
    %6 = vsyncpa [#allocation3], 0
    %7 = vsyncpa [#allocation4], 0
    // Predicated region
    $region2: #{tpu_custom_call.1} parent=1 // pred_check
      _
    $region3: #{tpu_custom_call.1} parent=1 // pred_check_branch
      %9 = sbr.rel (0) target = $region5
    $region4: #{tpu_custom_call.1} parent=1 // pred_region
      %s11 = ssub.s32 256, 256
      %12 = vsyncadd [#allocation3], %s11
      %s14 = sshll.u32 [#allocation2], 4
      %s15 = int_to_ptr.vmem [resolvable:$true] %s14
      %17 = dma.hbm_to_vmem [thread:$0]  %s0, 256, %s15, [#allocation3]
    $region5: #{tpu_custom_call.1} parent=1 // pred_fallthru
      _
    // Predicated region
    $region6: #{tpu_custom_call.1} parent=1 // pred_check
      _
    $region7: #{tpu_custom_call.1} parent=1 // pred_check_branch
      %19 = sbr.rel (0) target = $region9
    $region8: #{tpu_custom_call.1} parent=1 // pred_region
      %20 = dma.done [#allocation3], 256
    $region9: #{tpu_custom_call.1} parent=1 // pred_fallthru
      _
    %v21 = vld [vmem:[#allocation2] sm:$0xff]
    %v22 = vld [vmem:[#allocation2 + $0x8] sm:$0xff]
    %v23 = vadd.f32 %v21, %v22
    %24 = vadd.xlane.f32.xlu0 %v23
    %v25 = vpop.xlane.xlu0 %24
    %v26 = vmul.f32 %v21, %v21
    %v27 = vmul.f32 %v22, %v22
    %v28 = vadd.f32 %v26, %v27
    %29 = vadd.xlane.f32.xlu0 %v28
    %v30 = vpop.xlane.xlu0 %29
    %v31 = vmul.f32 %v25, 0.00390625
    %v32 = vmul.f32 %v30, 0.00390625
    %v33 = vmul.f32 %v31, %v31
    %v34 = vsub.f32 %v32, %v33
    %v35 = vadd.f32 %v34, 1e-05
    %v36 = vrsqrt.pop %v35
    %v37 = vsub.f32 %v21, %v31
    %v38 = vsub.f32 %v22, %v31
    %v39 = vmul.f32 %v37, %v36
    %v40 = vmul.f32 %v38, %v36
    %41 = vst [vmem:[#allocation5] sm:$0xff] %v39
    %42 = vst [vmem:[#allocation5 + $0x8] sm:$0xff] %v40
    // Predicated region
    $region10: #{tpu_custom_call.1} parent=1 // pred_check
      _
    $region11: #{tpu_custom_call.1} parent=1 // pred_check_branch
      %44 = sbr.rel (0) target = $region13
    $region12: #{tpu_custom_call.1} parent=1 // pred_region
      %s46 = ssub.s32 256, 256
      %47 = vsyncadd [#allocation4], %s46
      %s49 = sshll.u32 [#allocation5], 4
      %s50 = int_to_ptr.vmem [resolvable:$true] %s49
      %52 = dma.vmem_to_hbm [thread:$0]  %s50, 256, %s1, [#allocation4]
    $region13: #{tpu_custom_call.1} parent=1 // pred_fallthru
      _
    // Predicated region
    $region14: #{tpu_custom_call.1} parent=1 // pred_check
      _
    $region15: #{tpu_custom_call.1} parent=1 // pred_check_branch
      %54 = sbr.rel (0) target = $region17
    $region16: #{tpu_custom_call.1} parent=1 // pred_region
      %55 = dma.done [#allocation4], 256
    $region17: #{tpu_custom_call.1} parent=1 // pred_fallthru
      _
    %56 = vsyncpa [#allocation3], 1
    %57 = vsyncpa [#allocation4], 1

</llo_original>
